<compile_context>
chip_gen: v7x
topology: tpu7x:2x2x1
jax: 0.10.0
libtpu: 0.0.40
codegen_flags: <defaults>
</compile_context>

<pallas_src>
import numpy as np
import jax
import jax.numpy as jnp
from jax.experimental import pallas as pl
from jax.experimental.pallas import tpu as pltpu

HIGHEST = jax.lax.Precision.HIGHEST   # used by the pure-JAX reference only


# ----------------------------------------------------------------------------
# deterministic setup math (numpy float64) — replaces scipy.signal / scipy.special
# ----------------------------------------------------------------------------
def transition(N):
    Q = np.arange(N, dtype=np.float64)
    R = (2 * Q + 1)[:, None]
    j, i = np.meshgrid(Q, Q)
    A = np.where(i < j, -1, (-1.0) ** (i - j + 1)) * R
    B = (-1.0) ** Q[:, None] * R
    return A, B


def cont2discrete_bilinear(A, B, dt):
    # scipy.signal.cont2discrete(..., method='bilinear') for the (A, B) pair.
    n = A.shape[0]
    ima = np.eye(n) - 0.5 * dt * A
    Ad = np.linalg.solve(ima, np.eye(n) + 0.5 * dt * A)
    Bd = np.linalg.solve(ima, dt * B)          # (N, 1)
    return Ad, Bd[:, 0]


def legendre_matrix(N, x):
    # scipy.special.eval_legendre(arange(N)[:,None], x).T  -> (len(x), N)
    x = np.asarray(x, dtype=np.float64)
    P = np.zeros((x.shape[0], N), dtype=np.float64)
    P[:, 0] = 1.0
    if N > 1:
        P[:, 1] = x
    for n in range(1, N - 1):
        P[:, n + 1] = ((2 * n + 1) * x * P[:, n] - n * P[:, n - 1]) / (n + 1)
    return P


# ----------------------------------------------------------------------------
# fused FiLM kernel: affine + (folded HiPPO/spectral/Legendre/proj1) matmul + proj2
# grid = (batch tiles,), everything per-step fits trivially in VMEM
# ----------------------------------------------------------------------------
def make_film_kernel(bt, d_pad):
    """bt batch rows per grid step; d_pad = channel count padded to a multiple of 8."""

    def kernel(xw_ref,            # (bt*d_pad, T_max)  inputs, row = (batch, channel)
               awr_ref, abr_ref,  # (bt*d_pad, 1)      RevIN affine weight / bias per row
               h_ref,             # (T_max, P)         folded per-scale chain (+ proj1 w)
               w2_ref,            # (C, d_pad)         proj2 weight (zero-padded cols)
               b2e_ref,           # (C, 1)             proj2 bias with proj1 bias folded in
               out_ref):          # (bt, C, P)
        # RevIN-style affine (tiny VPU op on the (Mt, T_max) tile)
        f = xw_ref[...] * awr_ref[...] + abr_ref[...]
        # HiPPO recurrence -> SpectralConv1d -> irfft@t* -> Legendre reconstruction
        # -> proj1 over scales, all pre-folded into H: one MXU matmul.
        y1 = jnp.dot(f, h_ref[...], preferred_element_type=jnp.float32)   # (Mt, P)
        w2 = w2_ref[...]
        b2e = b2e_ref[...]
        # proj2 (Linear enc_in -> c_out) per batch row of the tile; bt is small and
        # static so this unrolls into a few tiny (C, Dp) x (Dp, P) matmuls.
        for i in range(bt):
            yb = y1[i * d_pad:(i + 1) * d_pad, :]                          # (Dp, P)
            out_ref[i] = (jnp.dot(w2, yb, preferred_element_type=jnp.float32)
                          + b2e)                                           # (C, P)

    return kernel


def film_pallas(xw, awr, abr, h, w2p, b2e, *, bt, d_pad):
    rows, t_max = xw.shape
    mt = bt * d_pad
    n_tiles = rows // mt
    c_out = w2p.shape[0]
    p = h.shape[1]
    return pl.pallas_call(
        make_film_kernel(bt, d_pad),
        out_shape=jax.ShapeDtypeStruct((n_tiles * bt, c_out, p), jnp.float32),
        grid=(n_tiles,),
        in_specs=[
            pl.BlockSpec((mt, t_max), lambda i: (i, 0)),        # x rows for this tile
            pl.BlockSpec((mt, 1), lambda i: (i, 0)),            # affine weight per row
            pl.BlockSpec((mt, 1), lambda i: (i, 0)),            # affine bias per row
            pl.BlockSpec((t_max, p), lambda i: (0, 0)),         # folded H (shared)
            pl.BlockSpec((c_out, d_pad), lambda i: (0, 0)),     # proj2 weight (shared)
            pl.BlockSpec((c_out, 1), lambda i: (0, 0)),         # folded bias (shared)
        ],
        out_specs=pl.BlockSpec((bt, c_out, p), lambda i: (i, 0, 0)),
        compiler_params=pltpu.CompilerParams(
            dimension_semantics=("parallel",)),                 # v7x megacore sharding
    )(xw, awr, abr, h, w2p, b2e)


# ----------------------------------------------------------------------------
# FiLM: parameter / constant setup + Pallas forward + pure-JAX reference
# ----------------------------------------------------------------------------
def build_film(parameter, key):
    seq_len = parameter["seq_len"]
    pred_len = parameter["pred_len"]
    D = parameter["enc_in"]
    C = parameter["c_out"]
    multiscale = [1, 2, 4]
    N = 256                                    # window_size = [256] (fixed in the module)
    S = len(multiscale)
    modes = min(32, min(pred_len, seq_len) // 2)
    P = pred_len
    T_l = [min(m * pred_len, seq_len) for m in multiscale]
    T_max = max(T_l)
    Dp = ((D + 7) // 8) * 8                    # pad channels to 8 sublanes (tiling rule)

    # ---- parameters (deterministic synthetic; same init scheme as the nn.Module) ----
    keys = jax.random.split(key, 2 * S + 4)
    wscale = 1.0 / (N * N)
    Wr_l = [wscale * jax.random.uniform(keys[2 * s], (N, N, modes), jnp.float32)
            for s in range(S)]
    Wi_l = [wscale * jax.random.uniform(keys[2 * s + 1], (N, N, modes), jnp.float32)
            for s in range(S)]
    affine_w = jnp.ones((1, 1, D), jnp.float32)
    affine_b = jnp.zeros((1, 1, D), jnp.float32)
    lim1 = 1.0 / np.sqrt(S)
    w1 = jax.random.uniform(keys[2 * S], (1, S), jnp.float32, -lim1, lim1)
    b1 = jax.random.uniform(keys[2 * S + 1], (1,), jnp.float32, -lim1, lim1)
    lim2 = 1.0 / np.sqrt(D)
    w2 = jax.random.uniform(keys[2 * S + 2], (C, D), jnp.float32, -lim2, lim2)
    b2 = jax.random.uniform(keys[2 * S + 3], (C,), jnp.float32, -lim2, lim2)

    # ---- offline float64 folding of the full per-scale linear chain into H ----
    #   x_dec_s[d, p] = sum_j f_s[j, d] * Hs[j, p]   (f_s = affined inputs of scale s)
    #   H[T_max - T_s + j, p] = sum_s w1[s] * Hs[j, p]   (proj1 weights folded in)
    # (offline cost is O(S * T * N^2); restructure per the review if pred_len is huge)
    w1_np = np.asarray(w1, np.float64)
    H = np.zeros((T_max, P), np.float64)
    At_l, Bd_l, E_l = [], [], []               # f32 copies for the pure-JAX reference
    for i, m in enumerate(multiscale):
        dt = 1.0 / pred_len / m
        A, Bm = transition(N)
        Ad, Bd = cont2discrete_bilinear(A, Bm, dt)
        vals = np.arange(0.0, 1.0, dt)
        E_P = legendre_matrix(N, 1.0 - 2.0 * vals)[-pred_len:, :]        # (P, N)
        T = T_l[i]
        off = T_max - T
        ts = pred_len - 1 if seq_len >= pred_len else T - 1
        karr = np.arange(modes)
        ang = 2.0 * np.pi * np.outer(karr, np.arange(T)) / T
        fc = np.cos(ang)                        # rfft real coefficients   (K, T)
        fs = -np.sin(ang)                       # rfft imag coefficients   (K, T)
        # irfft evaluated at the single index t* (imag parts of DC / Nyquist discarded)
        cr = 2.0 * np.cos(2.0 * np.pi * karr * ts / T) / T
        ci = -2.0 * np.sin(2.0 * np.pi * karr * ts / T) / T
        cr[0], ci[0] = 1.0 / T, 0.0
        nyq = (2 * karr == T)
        cr[nyq] = np.cos(2.0 * np.pi * karr[nyq] * ts / T) / T
        ci[nyq] = 0.0
        # fold irfft coeffs into the spectral weights, then the DFT + reconstruction:
        #   x_dec = sum_t c_t @ G_t,  G_t = M_t @ E_P^T
        Wr = np.asarray(Wr_l[i], np.float64)
        Wi = np.asarray(Wi_l[i], np.float64)
        Wa = Wr * cr + Wi * ci
        Wb = Wr * ci - Wi * cr
        M = (np.einsum("ijk,kt->tij", Wa, fc, optimize=True)
             + np.einsum("ijk,kt->tij", Wb, fs, optimize=True))           # (T, N, N)
        G = M @ E_P.T                                                     # (T, N, P)
        # fold the (linear) HiPPO recurrence:  c_t = sum_{j<=t} f_j * r(t-j),
        # r(tau) = B_d^T (A_d^T)^tau  =>  Hs[j] = sum_{t>=j} r(t-j) @ G_t
        r_mat = np.zeros((T, N), np.float64)
        r = Bd.copy()
        for tau in range(T):
            r_mat[tau] = r
            r = Ad @ r
        Hs = np.zeros((T, P), np.float64)
        for j in range(T):
            Hs[j] = np.einsum("tn,tnp->p", r_mat[:T - j], G[j:], optimize=True)
        H[off:, :] += w1_np[0, i] * Hs
        At_l.append(jnp.asarray(Ad.T, jnp.float32))
        Bd_l.append(jnp.asarray(Bd, jnp.float32))
        E_l.append(jnp.asarray(E_P, jnp.float32))

    H_j = jnp.asarray(H, jnp.float32)                           # (T_max, P)
    w2p_j = jnp.pad(w2, ((0, 0), (0, Dp - D)))                  # (C, Dp) zero-padded
    b2e_j = (b2 + b1[0] * jnp.sum(w2, axis=1)).reshape(C, 1)    # proj1 bias folded in
    aw_row = jnp.pad(affine_w.reshape(D), (0, Dp - D))          # (Dp,)
    ab_row = jnp.pad(affine_b.reshape(D), (0, Dp - D))

    # ---- Pallas forward: layout plumbing (transpose/pad/tile) + one fused kernel ----
    def forward(x_enc):
        B = x_enc.shape[0]
        bt = max(1, min(B, 256 // Dp))         # target ~256 MXU rows per tile
        if B >= 2:
            bt = min(bt, max(1, B // 2))       # keep >= 2 grid blocks (v7x megacore)
        n_tiles = pl.cdiv(B, bt)
        B_pad = n_tiles * bt
        xt = jnp.transpose(x_enc[:, -T_max:, :], (0, 2, 1))              # (B, D, T_max)
        xt = jnp.pad(xt, ((0, B_pad - B), (0, Dp - D), (0, 0)))          # (B_pad, Dp, T)
        xw = xt.reshape(B_pad * Dp, T_max)                               # lane-dense rows
        awr = jnp.tile(aw_row, B_pad)[:, None]                           # (B_pad*Dp, 1)
        abr = jnp.tile(ab_row, B_pad)[:, None]
        out = film_pallas(xw, awr, abr, H_j, w2p_j, b2e_j, bt=bt, d_pad=Dp)  # (B_pad,C,P)
        return jnp.transpose(out[:B], (0, 2, 1))                         # (B, P, C)

    # ---- pure-JAX reference (sequential recurrence + jnp.fft) for a self-check ----
    def reference(x_enc):
        B = x_enc.shape[0]
        x = x_enc * affine_w + affine_b
        outs = []
        for i in range(S):
            T = T_l[i]
            inp = jnp.transpose(x[:, -T:, :], (0, 2, 1))                 # (B, D, T)
            AdT = At_l[i]
            Bd = Bd_l[i]
            c = jnp.zeros((B, D, N), jnp.float32)
            cs = []
            for t in range(T):
                f = inp[:, :, t]
                c = (jnp.einsum("bdn,nm->bdm", c, AdT, precision=HIGHEST)
                     + f[..., None] * Bd)
                cs.append(c)
            xc = jnp.stack(cs, axis=-1)                                  # (B, D, N, T)
            xft = jnp.fft.rfft(xc, axis=-1)
            a = xft[..., :modes]
            Wr, Wi = Wr_l[i], Wi_l[i]
            outr = (jnp.einsum("bjix,iox->bjox", jnp.real(a), Wr, precision=HIGHEST)
                    - jnp.einsum("bjix,iox->bjox", jnp.imag(a), Wi, precision=HIGHEST))
            outi = (jnp.einsum("bjix,iox->bjox", jnp.real(a), Wi, precision=HIGHEST)
                    + jnp.einsum("bjix,iox->bjox", jnp.imag(a), Wr, precision=HIGHEST))
            out_ft = jnp.zeros(xft.shape[:-1] + (T // 2 + 1,), jnp.complex64)
            out_ft = out_ft.at[..., :modes].set(outr + 1j * outi)
            x_ifft = jnp.fft.irfft(out_ft, n=T, axis=-1)                 # (B, D, N, T)
            ts = pred_len - 1 if seq_len >= pred_len else T - 1
            x_dec_c = x_ifft[..., ts]                                    # (B, D, N)
            x_dec = jnp.einsum("bdn,pn->bdp", x_dec_c, E_l[i], precision=HIGHEST)
            outs.append(x_dec)
        xd = jnp.stack(outs, axis=-1)                                    # (B, D, P, S)
        y = jnp.einsum("bdps,os->bdpo", xd, w1, precision=HIGHEST)[..., 0] + b1[0]
        y = jnp.transpose(y, (0, 2, 1))                                  # (B, P, D)
        y = jnp.einsum("bpd,od->bpo", y, w2, precision=HIGHEST) + b2
        return y

    return forward, reference


if __name__ == "__main__":
    parameter = {"seq_len": 64, "pred_len": 16, "e_layers": 2,
                 "enc_in": 4, "c_out": 4}
    key = jax.random.PRNGKey(0)
    k_param, k_x = jax.random.split(key)
    forward, reference = build_film(parameter, k_param)

    batch = 2
    x_enc = jax.random.normal(
        k_x, (batch, parameter["seq_len"], parameter["enc_in"]), dtype=jnp.float32)

    y = jax.block_until_ready(jax.jit(forward)(x_enc))
    assert y.shape == (batch, parameter["pred_len"], parameter["c_out"]), y.shape
    assert bool(jnp.all(jnp.isfinite(y)))

    y_ref = jax.block_until_ready(jax.jit(reference)(x_enc))
    np.testing.assert_allclose(np.asarray(y), np.asarray(y_ref), rtol=5e-3, atol=5e-4)

    print("KERNEL_OK")
</pallas_src>

<mosaic_0001>
module attributes {stable_mosaic.version = 11 : i64} {
  func.func @kernel(%arg0: i32, %arg1: memref<8x64xf32, #tpu.memory_space<vmem>>, %arg2: memref<8x1xf32, #tpu.memory_space<vmem>>, %arg3: memref<8x1xf32, #tpu.memory_space<vmem>>, %arg4: memref<64x16xf32, #tpu.memory_space<vmem>>, %arg5: memref<4x8xf32, #tpu.memory_space<vmem>>, %arg6: memref<4x1xf32, #tpu.memory_space<vmem>>, %arg7: memref<1x4x16xf32, #tpu.memory_space<vmem>>) attributes {dimension_semantics = [#tpu.dimension_semantics<parallel>], iteration_bounds = array<i64: 2>, scalar_prefetch = 0 : i64, scratch_operands = 0 : i64, tpu.core_type = #tpu.core_type<tc>, window_params = [{transform_indices = @transform_0, window_bounds = array<i64: 8, 64>}, {transform_indices = @transform_1, window_bounds = array<i64: 8, 1>}, {transform_indices = @transform_2, window_bounds = array<i64: 8, 1>}, {pipeline_mode = #tpu.pipeline_mode<synchronous>, transform_indices = @transform_3, window_bounds = array<i64: 64, 16>}, {pipeline_mode = #tpu.pipeline_mode<synchronous>, transform_indices = @transform_4, window_bounds = array<i64: 4, 8>}, {pipeline_mode = #tpu.pipeline_mode<synchronous>, transform_indices = @transform_5, window_bounds = array<i64: 4, 1>}, {transform_indices = @transform_6, window_bounds = array<i64: 1, 4, 16>}]} {
    %c0 = arith.constant 0 : index
    %c0_0 = arith.constant 0 : index
    %0 = vector.load %arg1[%c0, %c0_0] : memref<8x64xf32, #tpu.memory_space<vmem>>, vector<8x64xf32>
    %c0_1 = arith.constant 0 : index
    %c0_2 = arith.constant 0 : index
    %1 = vector.load %arg2[%c0_1, %c0_2] : memref<8x1xf32, #tpu.memory_space<vmem>>, vector<8x1xf32>
    %2 = vector.broadcast %1 : vector<8x1xf32> to vector<8x64xf32>
    %3 = arith.mulf %0, %2 : vector<8x64xf32>
    %c0_3 = arith.constant 0 : index
    %c0_4 = arith.constant 0 : index
    %4 = vector.load %arg3[%c0_3, %c0_4] : memref<8x1xf32, #tpu.memory_space<vmem>>, vector<8x1xf32>
    %5 = vector.broadcast %4 : vector<8x1xf32> to vector<8x64xf32>
    %6 = arith.addf %3, %5 : vector<8x64xf32>
    %c0_5 = arith.constant 0 : index
    %c0_6 = arith.constant 0 : index
    %7 = vector.load %arg4[%c0_5, %c0_6] : memref<64x16xf32, #tpu.memory_space<vmem>>, vector<64x16xf32>
    %cst = arith.constant dense<0.000000e+00> : vector<8x16xf32>
    %8 = tpu.matmul %6, %7, %cst {dimension_numbers = #tpu.dot_dimension_numbers<[1], [0], [0], [1], [0, 0, 1, 1], [], []>} : vector<8x64xf32>, vector<64x16xf32>, vector<8x16xf32> -> vector<8x16xf32>
    %c0_7 = arith.constant 0 : index
    %c0_8 = arith.constant 0 : index
    %9 = vector.load %arg5[%c0_7, %c0_8] : memref<4x8xf32, #tpu.memory_space<vmem>>, vector<4x8xf32>
    %c0_9 = arith.constant 0 : index
    %c0_10 = arith.constant 0 : index
    %10 = vector.load %arg6[%c0_9, %c0_10] : memref<4x1xf32, #tpu.memory_space<vmem>>, vector<4x1xf32>
    %cst_11 = arith.constant dense<0.000000e+00> : vector<4x16xf32>
    %11 = tpu.matmul %9, %8, %cst_11 {dimension_numbers = #tpu.dot_dimension_numbers<[1], [0], [0], [1], [0, 0, 1, 1], [], []>} : vector<4x8xf32>, vector<8x16xf32>, vector<4x16xf32> -> vector<4x16xf32>
    %12 = vector.broadcast %10 : vector<4x1xf32> to vector<4x16xf32>
    %13 = arith.addf %11, %12 : vector<4x16xf32>
    %c0_12 = arith.constant 0 : index
    %c0_13 = arith.constant 0 : index
    %c0_14 = arith.constant 0 : index
    %14 = vector.load %arg7[%c0_12, %c0_13, %c0_14] : memref<1x4x16xf32, #tpu.memory_space<vmem>>, vector<1x4x16xf32>
    %15 = vector.shape_cast %14 : vector<1x4x16xf32> to vector<4x16xf32>
    %16 = vector.shape_cast %13 : vector<4x16xf32> to vector<1x4x16xf32>
    tpu.vector_store %arg7[%c0_12, %c0_13, %c0_14], %16 {strides = array<i32>} : memref<1x4x16xf32, #tpu.memory_space<vmem>>, vector<1x4x16xf32>,
    return
  }
  func.func @transform_0(%arg0: i32) -> (i32, i32) {
    %c0_i32 = arith.constant 0 : i32
    %c0_i32_0 = arith.constant 0 : i32
    return %arg0, %c0_i32 : i32, i32
  }
  func.func @transform_1(%arg0: i32) -> (i32, i32) {
    %c0_i32 = arith.constant 0 : i32
    %c0_i32_0 = arith.constant 0 : i32
    return %arg0, %c0_i32 : i32, i32
  }
  func.func @transform_2(%arg0: i32) -> (i32, i32) {
    %c0_i32 = arith.constant 0 : i32
    %c0_i32_0 = arith.constant 0 : i32
    return %arg0, %c0_i32 : i32, i32
  }
  func.func @transform_3(%arg0: i32) -> (i32, i32) {
    %c0_i32 = arith.constant 0 : i32
    %c0_i32_0 = arith.constant 0 : i32
    %c0_i32_1 = arith.constant 0 : i32
    return %c0_i32, %c0_i32_0 : i32, i32
  }
  func.func @transform_4(%arg0: i32) -> (i32, i32) {
    %c0_i32 = arith.constant 0 : i32
    %c0_i32_0 = arith.constant 0 : i32
    %c0_i32_1 = arith.constant 0 : i32
    return %c0_i32, %c0_i32_0 : i32, i32
  }
  func.func @transform_5(%arg0: i32) -> (i32, i32) {
    %c0_i32 = arith.constant 0 : i32
    %c0_i32_0 = arith.constant 0 : i32
    %c0_i32_1 = arith.constant 0 : i32
    return %c0_i32, %c0_i32_0 : i32, i32
  }
  func.func @transform_6(%arg0: i32) -> (i32, i32, i32) {
    %c0_i32 = arith.constant 0 : i32
    %c0_i32_0 = arith.constant 0 : i32
    %c0_i32_1 = arith.constant 0 : i32
    return %arg0, %c0_i32, %c0_i32_0 : i32, i32, i32
  }
}

</mosaic_0001>

<llo_original>
// kernel: tile.6
$region0: #{tile.6}
  #allocation0 [shape = 's32[1]{0}', space=sflag, size = 0x4, scoped, tag = 'scoped memory for tile.6']
  %s0 = inlined_call_operand.vmem [shape: f32[8], index: 0, kind: input, shape index: {}]
  %s1 = inlined_call_operand.vmem [shape: f32[2,8], index: 1, kind: output, shape index: {}]
  // Predicated region
  $region2: #{tile.6} parent=0 // pred_check
    _
  $region3: #{tile.6} parent=0 // pred_check_branch
    %3 = sbr.rel (0) target = $region5
  $region4: #{tile.6} parent=0 // pred_region
    _
  $region5: #{tile.6} parent=0 // pred_fallthru
    _
  %v4 = vld [vmem:[%s0] ss:$0 sm:$0xff]
  %5 = vst [vmem:[%s1] sm:$0x3] %v4

// kernel: tile.0
$region0: #{tile.0}
  %s0 = inlined_call_operand.vmem [shape: f32[2,8], index: 0, kind: input, shape index: {}]
  %s1 = inlined_call_operand.vmem [shape: f32[16,1], index: 1, kind: output, shape index: {}]
  $region1: #{tile.0} parent=0
    #allocation0 [shape = 'u8[4096]{0}', space=vmem, size = 0x1000, scoped, tag = 'scoped mem for input reshape']
    %s3 = sshllo.u32 0, 2
    %v4 = vld [vmem:[%s0] sm:%s3]
    %5 = vst [vmem:[#allocation0] sm:%s3] %v4
    %v6 = vld [vmem:[#allocation0] sm:$0x3]
    %vm7 = vcmask 7168
    %8 = vst.msk [vmem:[%s1] ss:$8 sm:$0x3] %vm7, %v6
    %v9 = vld [vmem:[#allocation0] sm:$0x3]
    %10 = vrot.lane.b32.xlu0 %v9, 127
    %v11 = vpop.permute.xlu0 %10
    %vm12 = vcmask 7168
    %s13 = scalar_lea.vmem %s1, 1
    %14 = vst.msk [vmem:[%s13] ss:$8 sm:$0x3] %vm12, %v11
    %v15 = vld [vmem:[#allocation0] sm:$0x3]
    %16 = vrot.lane.b32.xlu0 %v15, 126
    %v17 = vpop.permute.xlu0 %16
    %vm18 = vcmask 7168
    %s19 = scalar_lea.vmem %s1, 2
    %20 = vst.msk [vmem:[%s19] ss:$8 sm:$0x3] %vm18, %v17
    %v21 = vld [vmem:[#allocation0] sm:$0x3]
    %22 = vrot.lane.b32.xlu0 %v21, 125
    %v23 = vpop.permute.xlu0 %22
    %vm24 = vcmask 7168
    %s25 = scalar_lea.vmem %s1, 3
    %26 = vst.msk [vmem:[%s25] ss:$8 sm:$0x3] %vm24, %v23
    %v27 = vld [vmem:[#allocation0] sm:$0x3]
    %28 = vrot.lane.b32.xlu0 %v27, 124
    %v29 = vpop.permute.xlu0 %28
    %vm30 = vcmask 7168
    %s31 = scalar_lea.vmem %s1, 4
    %32 = vst.msk [vmem:[%s31] ss:$8 sm:$0x3] %vm30, %v29
    %v33 = vld [vmem:[#allocation0] sm:$0x3]
    %34 = vrot.lane.b32.xlu0 %v33, 123
    %v35 = vpop.permute.xlu0 %34
    %vm36 = vcmask 7168
    %s37 = scalar_lea.vmem %s1, 5
    %38 = vst.msk [vmem:[%s37] ss:$8 sm:$0x3] %vm36, %v35
    %v39 = vld [vmem:[#allocation0] sm:$0x3]
    %40 = vrot.lane.b32.xlu0 %v39, 122
    %v41 = vpop.permute.xlu0 %40
    %vm42 = vcmask 7168
    %s43 = scalar_lea.vmem %s1, 6
    %44 = vst.msk [vmem:[%s43] ss:$8 sm:$0x3] %vm42, %v41
    %v45 = vld [vmem:[#allocation0] sm:$0x3]
    %46 = vrot.lane.b32.xlu0 %v45, 121
    %v47 = vpop.permute.xlu0 %46
    %vm48 = vcmask 7168
    %s49 = scalar_lea.vmem %s1, 7
    %50 = vst.msk [vmem:[%s49] ss:$8 sm:$0x3] %vm48, %v47

// kernel: forward.1
$region0: #{forward.1}
  #allocation0 [shape = 'u32[]', space=smem, size = 0x4, offset = 0x4, fixed_abs, tag = 'smem constant byte address 0x4 - core index']
  #allocation1 [shape = 'u32[144,128]{1,0:T(1,128)}', space=vmem, size = 0x12000, scoped, tag = 'internal scratch']
  %s0 = inlined_call_operand.vmem [shape: f32[16,64], index: 0, kind: input, shape index: {}]
  %s1 = inlined_call_operand.vmem [shape: f32[16,1], index: 1, kind: input, shape index: {}]
  %s2 = inlined_call_operand.vmem [shape: f32[16,1], index: 2, kind: input, shape index: {}]
  %s3 = inlined_call_operand.vmem [shape: f32[64,16], index: 3, kind: input, shape index: {}]
  %s4 = inlined_call_operand.vmem [shape: f32[4,8], index: 4, kind: input, shape index: {}]
  %s5 = inlined_call_operand.vmem [shape: f32[4,1], index: 5, kind: input, shape index: {}]
  %s6 = inlined_call_operand.hbm [shape: f32[2,4,16], index: 6, kind: output, shape index: {}]
  %s7 = sld [smem:[#allocation0]]
  $region57: #{forward.1} parent=0
    _
  %s9 = ssub.s32 1, %s7
  %s10 = scalar_select 0, %s9, %s7
  $region1: #{forward.1} parent=0
    #allocation2 [shape = 'u8[4096]{0}', space=vmem, size = 0x1000, scoped, tag = 'output window, operand 0']
    #allocation3 [shape = 's32[2]{0}', space=sflag, size = 0x8, scoped, tag = 'scoped memory for forward.1']
    %11 = vsyncpa [#allocation3], 0
    %s12 = scalar_lea.sflag [#allocation3], 1
    %13 = vsyncpa %s12, 0
    loop: start=0, step=1, limit=4
    $region2: #{forward.1} parent=1 // loop_pre_header
      _
    $region3: #{forward.1} parent=1 // loop_header
      %s15 = sphi 0, %s19
      %p16 = scmp.ge.s32.totalorder %s15, 4
      %s25 = sphi 0, %s27
      %s28 = sphi 0, %s25
      %s29 = sphi 0, %s28
      %s45 = sphi 0, %s29
      %s51 = sphi 0, %s53
      %s54 = sphi 0, %s51
      %s55 = sphi 0, %s54
      %s71 = sphi 0, %s55
      %s77 = sphi 0, %s79
      %s80 = sphi 0, %s77
      %s81 = sphi 0, %s80
      %s97 = sphi 0, %s81
      %s101 = sphi 0, %s101
      %s103 = sphi 0, %s101
      %s104 = sphi 0, %s103
      %s118 = sphi 0, %s104
      %s122 = sphi 0, %s122
      %s124 = sphi 0, %s122
      %s125 = sphi 0, %s124
      %s139 = sphi 0, %s125
      %s143 = sphi 0, %s143
      %s145 = sphi 0, %s143
      %s146 = sphi 0, %s145
      %s160 = sphi 0, %s146
      %s166 = sphi 0, %s168
      %s169 = sphi 0, %s166
      %s170 = sphi 0, %s169
      %s186 = sphi 0, %s170
    $region4: #{forward.1} parent=1 // loop_header_branch
      %18 = sbr.rel (%p16) target = $region8
    $region5: #{forward.1} parent=1 // loop_body
      %s20 = ssub.s32 %s15, 1
      %s21 = ssub.s32 %s15, 2
      %s22 = sadd.s32 %s15, 1
      %s23 = ssub.s32 %s15, %s22
      %p24 = scmp.eq.s32.totalorder %s23, 0
      %s26 = sadd.s32 %s25, 1
      %s27 = scalar_select %p24, %s25, %s26
      %p30 = pneg %p24
      %p31 = scmp.eq.s32.totalorder %s15, 1
      %p32 = por %p30, %p31
      %p33 = scmp.ne.s32.totalorder %s25, %s28
      %p34 = scmp.eq.s32.totalorder %s15, 0
      %p35 = por %p33, %p34
      %p36 = scmp.ne.s32.totalorder %s25, %s28
      %p37 = scmp.eq.s32.totalorder %s20, 1
      %p38 = por %p36, %p37
      %p39 = scmp.ne.s32.totalorder %s28, %s29
      %p40 = scmp.eq.s32.totalorder %s20, 0
      %p41 = por %p39, %p40
      %p42 = scmp.ne.s32.totalorder %s28, %s29
      %p43 = scmp.eq.s32.totalorder %s21, 1
      %p44 = por %p42, %p43
      %p46 = scmp.ne.s32.totalorder %s29, %s45
      %p47 = scmp.eq.s32.totalorder %s21, 0
      %p48 = por %p46, %p47
      %s49 = ssub.s32 %s15, %s22
      %p50 = scmp.eq.s32.totalorder %s49, 0
      %s52 = sadd.s32 %s51, 1
      %s53 = scalar_select %p50, %s51, %s52
      %p56 = pneg %p50
      %p57 = scmp.eq.s32.totalorder %s15, 1
      %p58 = por %p56, %p57
      %p59 = scmp.ne.s32.totalorder %s51, %s54
      %p60 = scmp.eq.s32.totalorder %s15, 0
      %p61 = por %p59, %p60
      %p62 = scmp.ne.s32.totalorder %s51, %s54
      %p63 = scmp.eq.s32.totalorder %s20, 1
      %p64 = por %p62, %p63
      %p65 = scmp.ne.s32.totalorder %s54, %s55
      %p66 = scmp.eq.s32.totalorder %s20, 0
      %p67 = por %p65, %p66
      %p68 = scmp.ne.s32.totalorder %s54, %s55
      %p69 = scmp.eq.s32.totalorder %s21, 1
      %p70 = por %p68, %p69
      %p72 = scmp.ne.s32.totalorder %s55, %s71
      %p73 = scmp.eq.s32.totalorder %s21, 0
      %p74 = por %p72, %p73
      %s75 = ssub.s32 %s15, %s22
      %p76 = scmp.eq.s32.totalorder %s75, 0
      %s78 = sadd.s32 %s77, 1
      %s79 = scalar_select %p76, %s77, %s78
      %p82 = pneg %p76
      %p83 = scmp.eq.s32.totalorder %s15, 1
      %p84 = por %p82, %p83
      %p85 = scmp.ne.s32.totalorder %s77, %s80
      %p86 = scmp.eq.s32.totalorder %s15, 0
      %p87 = por %p85, %p86
      %p88 = scmp.ne.s32.totalorder %s77, %s80
      %p89 = scmp.eq.s32.totalorder %s20, 1
      %p90 = por %p88, %p89
      %p91 = scmp.ne.s32.totalorder %s80, %s81
      %p92 = scmp.eq.s32.totalorder %s20, 0
      %p93 = por %p91, %p92
      %p94 = scmp.ne.s32.totalorder %s80, %s81
      %p95 = scmp.eq.s32.totalorder %s21, 1
      %p96 = por %p94, %p95
      %p98 = scmp.ne.s32.totalorder %s81, %s97
      %p99 = scmp.eq.s32.totalorder %s21, 0
      %p100 = por %p98, %p99
      %s102 = sadd.s32 %s101, 1
      %p105 = scmp.eq.s32.totalorder %s15, 1
      %p106 = scmp.ne.s32.totalorder %s101, %s103
      %p107 = scmp.eq.s32.totalorder %s15, 0
      %p108 = por %p106, %p107
      %p109 = scmp.ne.s32.totalorder %s101, %s103
      %p110 = scmp.eq.s32.totalorder %s20, 1
      %p111 = por %p109, %p110
      %p112 = scmp.ne.s32.totalorder %s103, %s104
      %p113 = scmp.eq.s32.totalorder %s20, 0
      %p114 = por %p112, %p113
      %p115 = scmp.ne.s32.totalorder %s103, %s104
      %p116 = scmp.eq.s32.totalorder %s21, 1
      %p117 = por %p115, %p116
      %p119 = scmp.ne.s32.totalorder %s104, %s118
      %p120 = scmp.eq.s32.totalorder %s21, 0
      %p121 = por %p119, %p120
      %s123 = sadd.s32 %s122, 1
      %p126 = scmp.eq.s32.totalorder %s15, 1
      %p127 = scmp.ne.s32.totalorder %s122, %s124
      %p128 = scmp.eq.s32.totalorder %s15, 0
      %p129 = por %p127, %p128
      %p130 = scmp.ne.s32.totalorder %s122, %s124
      %p131 = scmp.eq.s32.totalorder %s20, 1
      %p132 = por %p130, %p131
      %p133 = scmp.ne.s32.totalorder %s124, %s125
      %p134 = scmp.eq.s32.totalorder %s20, 0
      %p135 = por %p133, %p134
      %p136 = scmp.ne.s32.totalorder %s124, %s125
      %p137 = scmp.eq.s32.totalorder %s21, 1
      %p138 = por %p136, %p137
      %p140 = scmp.ne.s32.totalorder %s125, %s139
      %p141 = scmp.eq.s32.totalorder %s21, 0
      %p142 = por %p140, %p141
      %s144 = sadd.s32 %s143, 1
      %p147 = scmp.eq.s32.totalorder %s15, 1
      %p148 = scmp.ne.s32.totalorder %s143, %s145
      %p149 = scmp.eq.s32.totalorder %s15, 0
      %p150 = por %p148, %p149
      %p151 = scmp.ne.s32.totalorder %s143, %s145
      %p152 = scmp.eq.s32.totalorder %s20, 1
      %p153 = por %p151, %p152
      %p154 = scmp.ne.s32.totalorder %s145, %s146
      %p155 = scmp.eq.s32.totalorder %s20, 0
      %p156 = por %p154, %p155
      %p157 = scmp.ne.s32.totalorder %s145, %s146
      %p158 = scmp.eq.s32.totalorder %s21, 1
      %p159 = por %p157, %p158
      %p161 = scmp.ne.s32.totalorder %s146, %s160
      %p162 = scmp.eq.s32.totalorder %s21, 0
      %p163 = por %p161, %p162
      %s164 = ssub.s32 %s15, %s22
      %p165 = scmp.eq.s32.totalorder %s164, 0
      %s167 = sadd.s32 %s166, 1
      %s168 = scalar_select %p165, %s166, %s167
      %p171 = pneg %p165
      %p172 = scmp.eq.s32.totalorder %s15, 1
      %p173 = por %p171, %p172
      %p174 = scmp.ne.s32.totalorder %s166, %s169
      %p175 = scmp.eq.s32.totalorder %s15, 0
      %p176 = por %p174, %p175
      %p177 = scmp.ne.s32.totalorder %s166, %s169
      %p178 = scmp.eq.s32.totalorder %s20, 1
      %p179 = por %p177, %p178
      %p180 = scmp.ne.s32.totalorder %s169, %s170
      %p181 = scmp.eq.s32.totalorder %s20, 0
      %p182 = por %p180, %p181
      %p183 = scmp.ne.s32.totalorder %s169, %s170
      %p184 = scmp.eq.s32.totalorder %s21, 1
      %p185 = por %p183, %p184
      %p187 = scmp.ne.s32.totalorder %s170, %s186
      %p188 = scmp.eq.s32.totalorder %s21, 0
      %p189 = por %p187, %p188
      %p190 = scmp.le.s32.totalorder 1, %s15
      %p191 = scmp.lt.s32.totalorder %s15, 3
      %p192 = pnand %p190, %p191
      %p193 = pneg %p192
      // Predicated region
      $region9: #{forward.1} parent=5 // pred_check
        _
      $region10: #{forward.1} parent=5 // pred_check_branch
        %195 = sbr.rel (%p192) target = $region12
      $region11: #{forward.1} parent=5 // pred_region
        %s196 = ssub.s32 %s15, 1
        // Predicated region
        $region13: #{forward.1} parent=11 // pred_check
          %p197 = pneg %p114
        $region14: #{forward.1} parent=11 // pred_check_branch
          %199 = sbr.rel (%p197) target = $region16
        $region15: #{forward.1} parent=11 // pred_region
          _
        $region16: #{forward.1} parent=11 // pred_fallthru
          _
        // Predicated region
        $region17: #{forward.1} parent=11 // pred_check
          %p200 = pneg %p135
        $region18: #{forward.1} parent=11 // pred_check_branch
          %202 = sbr.rel (%p200) target = $region20
        $region19: #{forward.1} parent=11 // pred_region
          _
        $region20: #{forward.1} parent=11 // pred_fallthru
          _
        // Predicated region
        $region21: #{forward.1} parent=11 // pred_check
          %p203 = pneg %p156
        $region22: #{forward.1} parent=11 // pred_check_branch
          %205 = sbr.rel (%p203) target = $region24
        $region23: #{forward.1} parent=11 // pred_region
          _
        $region24: #{forward.1} parent=11 // pred_fallthru
          _
      $region12: #{forward.1} parent=5 // pred_fallthru
        _
      %p206 = scmp.lt.s32.totalorder %s15, 2
      // Predicated region
      $region25: #{forward.1} parent=5 // pred_check
        %p207 = pneg %p206
      $region26: #{forward.1} parent=5 // pred_check_branch
        %209 = sbr.rel (%p207) target = $region28
      $region27: #{forward.1} parent=5 // pred_region
        // Predicated region
        $region29: #{forward.1} parent=27 // pred_check
          %p210 = pneg %p35
        $region30: #{forward.1} parent=27 // pred_check_branch
          %212 = sbr.rel (%p210) target = $region32
        $region31: #{forward.1} parent=27 // pred_region
          %p213 = scmp.lt.s32.totalorder %s15, 1
          %s214 = scalar_select %p213, %s15, 1
          %s215 = smul.addr %s214, 8
          %s216 = scalar_lea.vmem %s0, %s215
        $region32: #{forward.1} parent=27 // pred_fallthru
          _
        // Predicated region
        $region33: #{forward.1} parent=27 // pred_check
          %p217 = pneg %p61
        $region34: #{forward.1} parent=27 // pred_check_branch
          %219 = sbr.rel (%p217) target = $region36
        $region35: #{forward.1} parent=27 // pred_region
          %p220 = scmp.lt.s32.totalorder %s15, 1
          %s221 = scalar_select %p220, %s15, 1
          %s222 = smul.addr %s221, 8
          %s223 = scalar_lea.vmem %s1, %s222
        $region36: #{forward.1} parent=27 // pred_fallthru
          _
        // Predicated region
        $region37: #{forward.1} parent=27 // pred_check
          %p224 = pneg %p87
        $region38: #{forward.1} parent=27 // pred_check_branch
          %226 = sbr.rel (%p224) target = $region40
        $region39: #{forward.1} parent=27 // pred_region
          %p227 = scmp.lt.s32.totalorder %s15, 1
          %s228 = scalar_select %p227, %s15, 1
          %s229 = smul.addr %s228, 8
          %s230 = scalar_lea.vmem %s2, %s229
        $region40: #{forward.1} parent=27 // pred_fallthru
          _
      $region28: #{forward.1} parent=5 // pred_fallthru
        _
      %p231 = scmp.le.s32.totalorder 1, %s15
      %p232 = scmp.lt.s32.totalorder %s15, 3
      %p233 = pnand %p231, %p232
      %p234 = pneg %p233
      // Predicated region
      $region41: #{forward.1} parent=5 // pred_check
        _
      $region42: #{forward.1} parent=5 // pred_check_branch
        %236 = sbr.rel (%p233) target = $region44
      $region43: #{forward.1} parent=5 // pred_region
        %s237 = ssub.s32 %s15, 1
        %p238 = scmp.lt.s32.totalorder %s20, 1
        %s239 = scalar_select %p238, %s20, 1
        %s240 = smul.addr %s239, 8
        %s241 = scalar_lea.vmem %s0, %s240
        %p242 = pneg %p41
        %p243 = pneg %p38
        %p244 = scmp.lt.s32.totalorder %s20, 1
        %s245 = scalar_select %p244, %s20, 1
        %s246 = smul.addr %s245, 8
        %s247 = scalar_lea.vmem %s1, %s246
        %p248 = pneg %p67
        %p249 = pneg %p64
        %p250 = scmp.lt.s32.totalorder %s20, 1
        %s251 = scalar_select %p250, %s20, 1
        %s252 = smul.addr %s251, 8
        %s253 = scalar_lea.vmem %s2, %s252
        %p254 = pneg %p93
        %p255 = pneg %p90
        %p256 = pneg %p114
        %p257 = pneg %p111
        %p258 = pneg %p135
        %p259 = pneg %p132
        %p260 = pneg %p156
        %p261 = pneg %p153
        %p262 = pneg %p182
        %p263 = pneg %p179
        %s264 = sand.u32 %s169, 1
        %s265 = scalar_lea.sflag [#allocation3], %s264
        %s266 = sand.u32 %s169, 1
        %s267 = smul.addr %s266, 4
        %s268 = scalar_lea.vmem [#allocation2], %s267
        %p269 = scmp.lt.s32.totalorder %s20, 1
        %s270 = scalar_select %p269, %s20, 1
        %s271 = smul.addr %s270, 8
        %s272 = scalar_lea.vmem %s0, %s271
        %p273 = scmp.lt.s32.totalorder %s20, 1
        %s274 = scalar_select %p273, %s20, 1
        %s275 = smul.addr %s274, 8
        %s276 = scalar_lea.vmem %s1, %s275
        %p277 = scmp.lt.s32.totalorder %s20, 1
        %s278 = scalar_select %p277, %s20, 1
        %s279 = smul.addr %s278, 8
        %s280 = scalar_lea.vmem %s2, %s279
        %v281 = vld [vmem:[%s272] sm:$0xff]
        %v282 = vld [vmem:[%s276] sm:$0xff]
        %284 = vset.pattern.permute.xlu0 0
        %285 = vperm.xlu0 %284, %v282
        %v286 = vpop.permute.xlu0 %285
        %v288 = vmul.f32 %v281, %v286
        %v289 = vld [vmem:[%s280] sm:$0xff]
        %291 = vset.pattern.permute.xlu0 0
        %292 = vperm.xlu0 %291, %v289
        %v293 = vpop.permute.xlu0 %292
        %v295 = vadd.f32 %v288, %v293
        %v296 = vld [vmem:[%s3] sm:$0xff]
        %v297 = vld [vmem:[%s3 + $0x8] sm:$0xff]
        %v298 = vld [vmem:[%s3 + $0x10] sm:$0xff]
        %v299 = vld [vmem:[%s3 + $0x18] sm:$0xff]
        %v300 = vld [vmem:[%s3 + $0x20] sm:$0xff]
        %v301 = vld [vmem:[%s3 + $0x28] sm:$0xff]
        %v302 = vld [vmem:[%s3 + $0x30] sm:$0xff]
        %v303 = vld [vmem:[%s3 + $0x38] sm:$0xff]
        %vm304 = vcmask 523264
        %v306 = vsel %vm304, %v295, 0
        %308 = vmatprep.subr.mxu0 0.0
        %309 = vmatpush1.msra.mxu0 %v296
        %310 = vmatprep.subr.mxu0 0.0
        %311 = vmatpush1.msra.mxu0 %v297
        %312 = vmatprep.subr.mxu0 0.0
        %313 = vmatpush1.msra.mxu0 %v298
        %314 = vmatprep.subr.mxu0 0.0
        %315 = vmatpush1.msra.mxu0 %v299
        %316 = vmatprep.subr.mxu0 0.0
        %317 = vmatpush1.msra.mxu0 %v300
        %318 = vmatprep.subr.mxu0 0.0
        %319 = vmatpush1.msra.mxu0 %v301
        %320 = vmatprep.subr.mxu0 0.0
        %321 = vmatpush1.msra.mxu0 %v302
        %322 = vmatprep.subr.mxu0 0.0
        %323 = vmatpush1.msra.mxu0 %v303
        %324 = vmatprep.subr.mxu0 0.0
        %325 = vmatpush1.msra.mxu0 0.0
        %326 = vmatprep.subr.mxu0 0.0
        %327 = vmatpush1.msra.mxu0 0.0
        %328 = vmatprep.subr.mxu0 0.0
        %329 = vmatpush1.msra.mxu0 0.0
        %330 = vmatprep.subr.mxu0 0.0
        %331 = vmatpush1.msra.mxu0 0.0
        %332 = vmatprep.subr.mxu0 0.0
        %333 = vmatpush1.msra.mxu0 0.0
        %334 = vmatprep.subr.mxu0 0.0
        %335 = vmatpush1.msra.mxu0 0.0
        %336 = vmatprep.subr.mxu0 0.0
        %337 = vmatpush1.msra.mxu0 0.0
        %338 = vmatprep.subr.mxu0 0.0
        %339 = vmatpush1.msra.mxu0 0.0
        %340 = vmatprep.subr.mxu0 0.0
        %341 = vmatpush1.msra.mxu0 0.0
        %342 = vmatprep.subr.mxu0 0.0
        %343 = vmatpush1.msra.mxu0 0.0
        %344 = vmatprep.subr.mxu0 0.0
        %345 = vmatpush1.msra.mxu0 0.0
        %346 = vmatprep.subr.mxu0 0.0
        %347 = vmatpush1.msra.mxu0 0.0
        %348 = vmatprep.subr.mxu0 0.0
        %349 = vmatpush1.msra.mxu0 0.0
        %350 = vmatprep.subr.mxu0 0.0
        %351 = vmatpush1.msra.mxu0 0.0
        %352 = vmatprep.subr.mxu0 0.0
        %353 = vmatpush1.msra.mxu0 0.0
        %354 = vmatprep.subr.mxu0 0.0
        %355 = vmatpush1.msra.mxu0 0.0
        %356 = vmatprep.subr.mxu0 0.0
        %357 = vmatpush1.msra.mxu0 0.0
        %358 = vmatprep.subr.mxu0 0.0
        %359 = vmatpush1.msra.mxu0 0.0
        %360 = vmatprep.subr.mxu0 0.0
        %361 = vmatpush1.msra.mxu0 0.0
        %362 = vmatprep.subr.mxu0 0.0
        %363 = vmatpush1.msra.mxu0 0.0
        %364 = vmatprep.subr.mxu0 0.0
        %365 = vmatpush1.msra.mxu0 0.0
        %366 = vmatprep.subr.mxu0 0.0
        %367 = vmatpush1.msra.mxu0 0.0
        %368 = vmatprep.subr.mxu0 0.0
        %369 = vmatpush1.msra.mxu0 0.0
        %370 = vmatprep.subr.mxu0 0.0
        %371 = vmatpush1.msra.mxu0 0.0
        %372 = vmatprep.mubr.f32.mxu0 0.0
        %373 = vmatmul.mubr.f32.gmra.mrb[0].mxu0 %v306
        %v374 = vpop.f32.mrb[0].mxu0
        %v375 = vadd.f32 0.0, %v374
        %v376 = vpop.f32.mrb[0].mxu0
        %377 = vdwg.mxu0
        %v378 = vld [vmem:[%s4] sm:$0xf]
        %v379 = vld [vmem:[%s5] sm:$0xf]
        %381 = vset.pattern.permute.xlu0 0
        %382 = vperm.xlu0 %381, %v379
        %v383 = vpop.permute.xlu0 %382
        %vm385 = vcmask 64512
        %v387 = vsel %vm385, %v378, 0
        %389 = vmatprep.subr.mxu0 0.0
        %390 = vmatpush1.msra.mxu0 %v375
        %391 = vmatprep.subr.mxu0 0.0
        %392 = vmatpush1.msra.mxu0 0.0
        %393 = vmatprep.subr.mxu0 0.0
        %394 = vmatpush1.msra.mxu0 0.0
        %395 = vmatprep.subr.mxu0 0.0
        %396 = vmatpush1.msra.mxu0 0.0
        %397 = vmatprep.subr.mxu0 0.0
        %398 = vmatpush1.msra.mxu0 0.0
        %399 = vmatprep.subr.mxu0 0.0
        %400 = vmatpush1.msra.mxu0 0.0
        %401 = vmatprep.subr.mxu0 0.0
        %402 = vmatpush1.msra.mxu0 0.0
        %403 = vmatprep.subr.mxu0 0.0
        %404 = vmatpush1.msra.mxu0 0.0
        %405 = vmatprep.subr.mxu0 0.0
        %406 = vmatpush1.msra.mxu0 0.0
        %407 = vmatprep.subr.mxu0 0.0
        %408 = vmatpush1.msra.mxu0 0.0
        %409 = vmatprep.subr.mxu0 0.0
        %410 = vmatpush1.msra.mxu0 0.0
        %411 = vmatprep.subr.mxu0 0.0
        %412 = vmatpush1.msra.mxu0 0.0
        %413 = vmatprep.subr.mxu0 0.0
        %414 = vmatpush1.msra.mxu0 0.0
        %415 = vmatprep.subr.mxu0 0.0
        %416 = vmatpush1.msra.mxu0 0.0
        %417 = vmatprep.subr.mxu0 0.0
        %418 = vmatpush1.msra.mxu0 0.0
        %419 = vmatprep.subr.mxu0 0.0
        %420 = vmatpush1.msra.mxu0 0.0
        %421 = vmatprep.subr.mxu0 0.0
        %422 = vmatpush1.msra.mxu0 0.0
        %423 = vmatprep.subr.mxu0 0.0
        %424 = vmatpush1.msra.mxu0 0.0
        %425 = vmatprep.subr.mxu0 0.0
        %426 = vmatpush1.msra.mxu0 0.0
        %427 = vmatprep.subr.mxu0 0.0
        %428 = vmatpush1.msra.mxu0 0.0
        %429 = vmatprep.subr.mxu0 0.0
        %430 = vmatpush1.msra.mxu0 0.0
        %431 = vmatprep.subr.mxu0 0.0
        %432 = vmatpush1.msra.mxu0 0.0
        %433 = vmatprep.subr.mxu0 0.0
        %434 = vmatpush1.msra.mxu0 0.0
        %435 = vmatprep.subr.mxu0 0.0
        %436 = vmatpush1.msra.mxu0 0.0
        %437 = vmatprep.subr.mxu0 0.0
        %438 = vmatpush1.msra.mxu0 0.0
        %439 = vmatprep.subr.mxu0 0.0
        %440 = vmatpush1.msra.mxu0 0.0
        %441 = vmatprep.subr.mxu0 0.0
        %442 = vmatpush1.msra.mxu0 0.0
        %443 = vmatprep.subr.mxu0 0.0
        %444 = vmatpush1.msra.mxu0 0.0
        %445 = vmatprep.subr.mxu0 0.0
        %446 = vmatpush1.msra.mxu0 0.0
        %447 = vmatprep.subr.mxu0 0.0
        %448 = vmatpush1.msra.mxu0 0.0
        %449 = vmatprep.subr.mxu0 0.0
        %450 = vmatpush1.msra.mxu0 0.0
        %451 = vmatprep.subr.mxu0 0.0
        %452 = vmatpush1.msra.mxu0 0.0
        %453 = vmatprep.mubr.f32.mxu0 0.0
        %454 = vmatmul.mubr.f32.gmra.mrb[0].mxu0 %v387
        %v455 = vpop.f32.mrb[0].mxu0
        %v456 = vadd.f32 %v383, %v455
        %v457 = vpop.f32.mrb[0].mxu0
        %458 = vdwg.mxu0
        %vm459 = vcmask 125952
        %460 = vst.msk [vmem:[%s268] sm:$0xf] %vm459, %v456
        %s461 = sand.u32 %s169, 1
        %s462 = scalar_lea.sflag [#allocation3], %s461
        %s463 = sand.u32 %s169, 1
        %s464 = smul.addr %s463, 4
        %s465 = scalar_lea.vmem [#allocation2], %s464
        // Predicated region
        $region45: #{forward.1} parent=43 // pred_check
          %p466 = pneg %p179
        $region46: #{forward.1} parent=43 // pred_check_branch
          %468 = sbr.rel (%p466) target = $region48
        $region47: #{forward.1} parent=43 // pred_region
          %s470 = ssub.s32 64, 64
          %471 = vsyncadd %s462, %s470
          %s472 = smul.addr %s20, 64
          %s473 = scalar_lea.hbm %s6, %s472
          %s475 = sshll.u32 %s465, 4
          %s476 = int_to_ptr.vmem [resolvable:$true] %s475
          %478 = dma.vmem_to_hbm [thread:$0]  %s476, 64, %s473, %s462
        $region48: #{forward.1} parent=43 // pred_fallthru
          _
      $region44: #{forward.1} parent=5 // pred_fallthru
        _
      %p479 = scmp.le.s32.totalorder 2, %s15
      // Predicated region
      $region49: #{forward.1} parent=5 // pred_check
        %p480 = pneg %p479
      $region50: #{forward.1} parent=5 // pred_check_branch
        %482 = sbr.rel (%p480) target = $region52
      $region51: #{forward.1} parent=5 // pred_region
        %s483 = ssub.s32 %s15, 2
        // Predicated region
        $region53: #{forward.1} parent=51 // pred_check
          %p484 = pneg %p185
        $region54: #{forward.1} parent=51 // pred_check_branch
          %486 = sbr.rel (%p484) target = $region56
        $region55: #{forward.1} parent=51 // pred_region
          %s487 = sand.u32 %s170, 1
          %s488 = scalar_lea.sflag [#allocation3], %s487
          %s489 = sand.u32 %s170, 1
          %s490 = smul.addr %s489, 4
          %s491 = scalar_lea.vmem [#allocation2], %s490
          %492 = dma.done %s488, 64
        $region56: #{forward.1} parent=51 // pred_fallthru
          _
      $region52: #{forward.1} parent=5 // pred_fallthru
        _
    $region6: #{forward.1} parent=1 // loop_footer
      %s19 = sadd.s32 1, %s15
    $region7: #{forward.1} parent=1 // loop_footer_branch
      %14 = sbr.rel target = $region3
    $region8: #{forward.1} parent=1 // loop_exit
      _
    %493 = vsyncpa [#allocation3], 1
    %s494 = scalar_lea.sflag [#allocation3], 1
    %495 = vsyncpa %s494, 1

</llo_original>
